<compile_context>
chip_gen: v5e
topology: v5e:2x2
jax: 0.10.0
libtpu: 0.0.40
codegen_flags: <defaults>
</compile_context>

<pallas_src>
import functools
from math import sqrt

import jax
import jax.numpy as jnp
from jax.experimental import pallas as pl
from jax.experimental.pallas import tpu as pltpu


# ----------------------------- Pallas kernel -------------------------------

def _fused_kernel(x_ref, w_ref, b_ref, h_ref, g_ref, *,
                  activations, in_dim, gram_rows):
    """Single grid step — both views processed with a static Python loop.

    x_ref: (V, N, in_dim)  f32 unpadded input activations
    w_ref: (V, L, P, P)    bf16 lane-padded weights (stored in_dim x out_dim)
    b_ref: (V, L, 1, P)    f32 lane-padded biases
    h_ref: (V, N, P)       f32 final hidden activations (lane-dense)
    g_ref: (V, G, P)       f32 top-G sublanes of the Gram matrix X^T X
    """
    n_views = x_ref.shape[0]
    for v in range(n_views):                              # static unroll: views
        x = x_ref[v]                                      # (N, in_dim) f32
        for l, act in enumerate(activations):             # static unroll: layers
            if l == 0:
                w = w_ref[v, l, :in_dim, :]               # (in_dim, P) bf16
            else:
                w = w_ref[v, l]                           # (P, P) bf16
            # bf16 operands -> single-pass MXU, f32 accumulation.
            y = jnp.dot(x.astype(jnp.bfloat16), w,
                        preferred_element_type=jnp.float32)
            y = y + b_ref[v, l]                           # f32 elementwise
            if act == 'relu':
                y = jnp.maximum(y, 0.0)
            x = y                                         # (N, P) f32
        h_ref[v] = x.astype(h_ref.dtype)
        # Gram: contract over the batch axis of both operands (bf16 in, f32 acc).
        xb = x.astype(jnp.bfloat16)
        g = jax.lax.dot_general(
            xb, xb, dimension_numbers=(((0,), (0,)), ((), ())),
            preferred_element_type=jnp.float32)           # (P, P)
        g_ref[v] = g[:gram_rows].astype(g_ref.dtype)      # store only needed rows


def fused_mlp_gram(x_all, w_all, b_all, activations, in_dim, out_dim):
    V, N, D = x_all.shape
    _, L, P, _ = w_all.shape
    G = _round_up(out_dim, 8)

    kernel = functools.partial(
        _fused_kernel, activations=tuple(activations),
        in_dim=in_dim, gram_rows=G)

    # Advisory cost estimate for XLA's scheduler.
    flops_per_view = 2 * N * in_dim * P + 2 * N * P * P * (L - 1) + 2 * N * P * P
    bytes_accessed = (x_all.size * x_all.dtype.itemsize
                      + w_all.size * w_all.dtype.itemsize
                      + b_all.size * b_all.dtype.itemsize
                      + V * N * P * 4 + V * G * P * 4)

    h, g = pl.pallas_call(
        kernel,
        grid=(1,),
        in_specs=[
            pl.BlockSpec((V, N, D), lambda i: (0, 0, 0)),
            pl.BlockSpec((V, L, P, P), lambda i: (0, 0, 0, 0)),
            pl.BlockSpec((V, L, 1, P), lambda i: (0, 0, 0, 0)),
        ],
        out_specs=(
            pl.BlockSpec((V, N, P), lambda i: (0, 0, 0)),
            pl.BlockSpec((V, G, P), lambda i: (0, 0, 0)),
        ),
        out_shape=(
            jax.ShapeDtypeStruct((V, N, P), jnp.float32),
            jax.ShapeDtypeStruct((V, G, P), jnp.float32),
        ),
        compiler_params=pltpu.CompilerParams(
            dimension_semantics=("arbitrary",)),
        cost_estimate=pl.CostEstimate(
            flops=V * flops_per_view, transcendentals=0,
            bytes_accessed=bytes_accessed),
    )(x_all, w_all, b_all)
    return h, g


# ------------------------ parameter init (padded) ---------------------------

def _round_up(x, m=128):
    return ((x + m - 1) // m) * m


def init_spectralnet_params(key, in_dim, arch, view_size):
    """Deterministic init mirroring stack_layers; weights stored as W^T
    (in_dim x out_dim), zero-padded to a common lane width P, cast to bf16."""
    sizes = [in_dim] + [a['size'] for a in arch]
    P = _round_up(max(sizes), 128)
    L = len(arch)
    V = view_size
    w_all = jnp.zeros((V, L, P, P), jnp.float32)
    b_all = jnp.zeros((V, L, 1, P), jnp.float32)
    for vi in range(V):
        d = in_dim
        for li, spec in enumerate(arch):
            out_dim = spec['size']
            key, kw, kb = jax.random.split(key, 3)
            bound = 1.0 / sqrt(d)                      # PyTorch Linear default
            w = jax.random.uniform(kw, (d, out_dim), jnp.float32, -bound, bound)
            b = jax.random.uniform(kb, (1, out_dim), jnp.float32, -bound, bound)
            w_all = w_all.at[vi, li, :d, :out_dim].set(w)
            b_all = b_all.at[vi, li, :, :out_dim].set(b)
            d = out_dim
    return {
        'w': w_all.astype(jnp.bfloat16),               # bf16 MXU operands
        'b': b_all,                                    # f32 elementwise
        'activations': tuple(a.get('activation') for a in arch),
        'pad': P,
        'in_dim': in_dim,
        'out_dim': arch[-1]['size'],
    }


# -------------------------------- forward -----------------------------------

def spectral_net_forward(params, data_batch_mv_list, epsilon=0.0005):
    V = params['w'].shape[0]
    out_dim = params['out_dim']
    in_dim = params['in_dim']
    n = data_batch_mv_list[0].shape[0]

    # Pack views (no wrapper-side feature padding — handled in-kernel).
    x_all = jnp.stack(data_batch_mv_list, axis=0)                 # [V, N, in_dim]

    # Fused MLP + Gram (single pallas_call, single grid step, both views).
    h_pad, g_pad = fused_mlp_gram(x_all, params['w'], params['b'],
                                  params['activations'], in_dim, out_dim)
    h = h_pad[:, :, :out_dim]                                     # [V, N, d]
    g = g_pad[:, :out_dim, :out_dim]                              # [V, d, d]

    # OrthogonalLayer tail on the tiny d x d matrices (plain JAX, batched).
    # TODO(synk): Cholesky / triangular inverse have no Pallas TPU primitive.
    g = g + epsilon * jnp.eye(out_dim, dtype=jnp.float32)
    L = jnp.linalg.cholesky(g)
    eye = jnp.broadcast_to(jnp.eye(out_dim, dtype=jnp.float32), L.shape)
    L_inv = jax.scipy.linalg.solve_triangular(L, eye, lower=True)
    Q = jnp.swapaxes(L_inv, -1, -2) * sqrt(n)
    # TODO(synk): final (N x d) @ (d x d) projection left to XLA — a pallas_call
    # launch would dwarf the compute at d=16.
    out = jnp.einsum('vnd,vde->vne', h, Q)
    return [out[vi] for vi in range(V)]


# -------------------------- pure-JAX reference -------------------------------

def _reference_forward(params, data_batch_mv_list, epsilon=0.0005):
    """Same mixed-precision policy (bf16 dot inputs, f32 accumulate/elementwise)
    so the comparison isolates fusion / padding / layout correctness."""
    V = params['w'].shape[0]
    out_dim = params['out_dim']
    in_dim = params['in_dim']
    n = data_batch_mv_list[0].shape[0]
    outs = []
    for vi in range(V):
        x = data_batch_mv_list[vi]
        for li, act in enumerate(params['activations']):
            w = params['w'][vi, li]
            if li == 0:
                w = w[:in_dim]
            x = jnp.dot(x.astype(jnp.bfloat16), w,
                        preferred_element_type=jnp.float32) + params['b'][vi, li]
            if act == 'relu':
                x = jnp.maximum(x, 0.0)
        x = x[:, :out_dim]
        xb = x.astype(jnp.bfloat16)
        g = jax.lax.dot_general(xb, xb, (((0,), (0,)), ((), ())),
                                preferred_element_type=jnp.float32)
        g = g + epsilon * jnp.eye(out_dim, dtype=jnp.float32)
        L = jnp.linalg.cholesky(g)
        L_inv = jax.scipy.linalg.solve_triangular(
            L, jnp.eye(out_dim, dtype=jnp.float32), lower=True)
        outs.append(x @ (L_inv.T * sqrt(n)))
    return outs


# ---------------------------------- main -------------------------------------

if __name__ == "__main__":
    key = jax.random.PRNGKey(0)

    view_size = 2
    in_dim = 32
    batch = 64
    arch = [
        {'layer': 'linear', 'size': 64, 'activation': 'relu'},
        {'layer': 'linear', 'size': 32, 'activation': 'relu'},
        {'layer': 'linear', 'size': 16, 'activation': None},
    ]

    key, kp, kd0, kd1 = jax.random.split(key, 4)
    params = init_spectralnet_params(kp, in_dim, arch, view_size)
    data_mv = [
        jax.random.normal(kd0, (batch, in_dim), jnp.float32),
        jax.random.normal(kd1, (batch, in_dim), jnp.float32),
    ]

    outs = spectral_net_forward(params, data_mv)
    outs = [jax.block_until_ready(o) for o in outs]

    # sanity: shape, finiteness, and agreement with a pure-JAX reference
    refs = _reference_forward(params, data_mv)
    for o, r in zip(outs, refs):
        assert o.shape == (batch, arch[-1]['size'])
        assert bool(jnp.all(jnp.isfinite(o)))
        assert float(jnp.max(jnp.abs(o - r))) < 1e-2

    print("KERNEL_OK")
</pallas_src>

<mosaic_0001>
module attributes {stable_mosaic.version = 11 : i64} {
  func.func @_fused_kernel(%arg0: i32, %arg1: memref<2x64x32xf32, #tpu.memory_space<vmem>>, %arg2: memref<2x3x128x128xbf16, #tpu.memory_space<vmem>>, %arg3: memref<2x3x1x128xf32, #tpu.memory_space<vmem>>, %arg4: memref<2x64x128xf32, #tpu.memory_space<vmem>>, %arg5: memref<2x16x128xf32, #tpu.memory_space<vmem>>) attributes {dimension_semantics = [#tpu.dimension_semantics<arbitrary>], iteration_bounds = array<i64: 1>, scalar_prefetch = 0 : i64, scratch_operands = 0 : i64, tpu.core_type = #tpu.core_type<tc>, window_params = [{pipeline_mode = #tpu.pipeline_mode<synchronous>, transform_indices = @transform_0, window_bounds = array<i64: 2, 64, 32>}, {pipeline_mode = #tpu.pipeline_mode<synchronous>, transform_indices = @transform_1, window_bounds = array<i64: 2, 3, 128, 128>}, {pipeline_mode = #tpu.pipeline_mode<synchronous>, transform_indices = @transform_2, window_bounds = array<i64: 2, 3, 1, 128>}, {pipeline_mode = #tpu.pipeline_mode<synchronous>, transform_indices = @transform_3, window_bounds = array<i64: 2, 64, 128>}, {pipeline_mode = #tpu.pipeline_mode<synchronous>, transform_indices = @transform_4, window_bounds = array<i64: 2, 16, 128>}]} {
    %c0 = arith.constant 0 : index
    %c0_0 = arith.constant 0 : index
    %c0_1 = arith.constant 0 : index
    %0 = vector.load %arg1[%c0, %c0_0, %c0_1] : memref<2x64x32xf32, #tpu.memory_space<vmem>>, vector<1x64x32xf32>
    %1 = vector.shape_cast %0 : vector<1x64x32xf32> to vector<64x32xf32>
    %c0_2 = arith.constant 0 : index
    %c0_3 = arith.constant 0 : index
    %c0_4 = arith.constant 0 : index
    %c0_5 = arith.constant 0 : index
    %2 = vector.load %arg2[%c0_2, %c0_3, %c0_4, %c0_5] : memref<2x3x128x128xbf16, #tpu.memory_space<vmem>>, vector<1x1x32x128xbf16>
    %3 = vector.shape_cast %2 : vector<1x1x32x128xbf16> to vector<32x128xbf16>
    %4 = arith.truncf %1 : vector<64x32xf32> to vector<64x32xbf16>
    %cst = arith.constant dense<0.000000e+00> : vector<64x128xf32>
    %5 = tpu.matmul %4, %3, %cst {dimension_numbers = #tpu.dot_dimension_numbers<[1], [0], [0], [1], [0, 0, 1, 1], [], []>} : vector<64x32xbf16>, vector<32x128xbf16>, vector<64x128xf32> -> vector<64x128xf32>
    %c0_6 = arith.constant 0 : index
    %c0_7 = arith.constant 0 : index
    %c0_8 = arith.constant 0 : index
    %c0_9 = arith.constant 0 : index
    %6 = vector.load %arg3[%c0_6, %c0_7, %c0_8, %c0_9] : memref<2x3x1x128xf32, #tpu.memory_space<vmem>>, vector<1x1x1x128xf32>
    %7 = vector.shape_cast %6 : vector<1x1x1x128xf32> to vector<1x128xf32>
    %8 = vector.broadcast %7 : vector<1x128xf32> to vector<64x128xf32>
    %9 = arith.addf %5, %8 : vector<64x128xf32>
    %cst_10 = arith.constant 0.000000e+00 : f32
    %10 = vector.broadcast %cst_10 : f32 to vector<64x128xf32>
    %11 = arith.maximumf %9, %10 : vector<64x128xf32>
    %c0_11 = arith.constant 0 : index
    %c1 = arith.constant 1 : index
    %c0_12 = arith.constant 0 : index
    %c0_13 = arith.constant 0 : index
    %12 = vector.load %arg2[%c0_11, %c1, %c0_12, %c0_13] : memref<2x3x128x128xbf16, #tpu.memory_space<vmem>>, vector<1x1x128x128xbf16>
    %13 = vector.shape_cast %12 : vector<1x1x128x128xbf16> to vector<128x128xbf16>
    %14 = arith.truncf %11 : vector<64x128xf32> to vector<64x128xbf16>
    %cst_14 = arith.constant dense<0.000000e+00> : vector<64x128xf32>
    %15 = tpu.matmul %14, %13, %cst_14 {dimension_numbers = #tpu.dot_dimension_numbers<[1], [0], [0], [1], [0, 0, 1, 1], [], []>} : vector<64x128xbf16>, vector<128x128xbf16>, vector<64x128xf32> -> vector<64x128xf32>
    %c0_15 = arith.constant 0 : index
    %c1_16 = arith.constant 1 : index
    %c0_17 = arith.constant 0 : index
    %c0_18 = arith.constant 0 : index
    %16 = vector.load %arg3[%c0_15, %c1_16, %c0_17, %c0_18] : memref<2x3x1x128xf32, #tpu.memory_space<vmem>>, vector<1x1x1x128xf32>
    %17 = vector.shape_cast %16 : vector<1x1x1x128xf32> to vector<1x128xf32>
    %18 = vector.broadcast %17 : vector<1x128xf32> to vector<64x128xf32>
    %19 = arith.addf %15, %18 : vector<64x128xf32>
    %cst_19 = arith.constant 0.000000e+00 : f32
    %20 = vector.broadcast %cst_19 : f32 to vector<64x128xf32>
    %21 = arith.maximumf %19, %20 : vector<64x128xf32>
    %c0_20 = arith.constant 0 : index
    %c2 = arith.constant 2 : index
    %c0_21 = arith.constant 0 : index
    %c0_22 = arith.constant 0 : index
    %22 = vector.load %arg2[%c0_20, %c2, %c0_21, %c0_22] : memref<2x3x128x128xbf16, #tpu.memory_space<vmem>>, vector<1x1x128x128xbf16>
    %23 = vector.shape_cast %22 : vector<1x1x128x128xbf16> to vector<128x128xbf16>
    %24 = arith.truncf %21 : vector<64x128xf32> to vector<64x128xbf16>
    %cst_23 = arith.constant dense<0.000000e+00> : vector<64x128xf32>
    %25 = tpu.matmul %24, %23, %cst_23 {dimension_numbers = #tpu.dot_dimension_numbers<[1], [0], [0], [1], [0, 0, 1, 1], [], []>} : vector<64x128xbf16>, vector<128x128xbf16>, vector<64x128xf32> -> vector<64x128xf32>
    %c0_24 = arith.constant 0 : index
    %c2_25 = arith.constant 2 : index
    %c0_26 = arith.constant 0 : index
    %c0_27 = arith.constant 0 : index
    %26 = vector.load %arg3[%c0_24, %c2_25, %c0_26, %c0_27] : memref<2x3x1x128xf32, #tpu.memory_space<vmem>>, vector<1x1x1x128xf32>
    %27 = vector.shape_cast %26 : vector<1x1x1x128xf32> to vector<1x128xf32>
    %28 = vector.broadcast %27 : vector<1x128xf32> to vector<64x128xf32>
    %29 = arith.addf %25, %28 : vector<64x128xf32>
    %c0_28 = arith.constant 0 : index
    %c0_29 = arith.constant 0 : index
    %c0_30 = arith.constant 0 : index
    %30 = vector.load %arg4[%c0_28, %c0_29, %c0_30] : memref<2x64x128xf32, #tpu.memory_space<vmem>>, vector<1x64x128xf32>
    %31 = vector.shape_cast %30 : vector<1x64x128xf32> to vector<64x128xf32>
    %32 = vector.shape_cast %29 : vector<64x128xf32> to vector<1x64x128xf32>
    tpu.vector_store %arg4[%c0_28, %c0_29, %c0_30], %32 {strides = array<i32>} : memref<2x64x128xf32, #tpu.memory_space<vmem>>, vector<1x64x128xf32>,
    %33 = arith.truncf %29 : vector<64x128xf32> to vector<64x128xbf16>
    %cst_31 = arith.constant dense<0.000000e+00> : vector<128x128xf32>
    %34 = tpu.matmul %33, %33, %cst_31 {dimension_numbers = #tpu.dot_dimension_numbers<[0], [0], [1], [1], [0, 1, 1, 1], [], []>} : vector<64x128xbf16>, vector<64x128xbf16>, vector<128x128xf32> -> vector<128x128xf32>
    %35 = vector.extract_strided_slice %34 {offsets = [0, 0], sizes = [16, 128], strides = [1, 1]} : vector<128x128xf32> to vector<16x128xf32>
    %c0_32 = arith.constant 0 : index
    %c0_33 = arith.constant 0 : index
    %c0_34 = arith.constant 0 : index
    %36 = vector.load %arg5[%c0_32, %c0_33, %c0_34] : memref<2x16x128xf32, #tpu.memory_space<vmem>>, vector<1x16x128xf32>
    %37 = vector.shape_cast %36 : vector<1x16x128xf32> to vector<16x128xf32>
    %38 = vector.shape_cast %35 : vector<16x128xf32> to vector<1x16x128xf32>
    tpu.vector_store %arg5[%c0_32, %c0_33, %c0_34], %38 {strides = array<i32>} : memref<2x16x128xf32, #tpu.memory_space<vmem>>, vector<1x16x128xf32>,
    %c1_35 = arith.constant 1 : index
    %c0_36 = arith.constant 0 : index
    %c0_37 = arith.constant 0 : index
    %39 = vector.load %arg1[%c1_35, %c0_36, %c0_37] : memref<2x64x32xf32, #tpu.memory_space<vmem>>, vector<1x64x32xf32>
    %40 = vector.shape_cast %39 : vector<1x64x32xf32> to vector<64x32xf32>
    %c1_38 = arith.constant 1 : index
    %c0_39 = arith.constant 0 : index
    %c0_40 = arith.constant 0 : index
    %c0_41 = arith.constant 0 : index
    %41 = vector.load %arg2[%c1_38, %c0_39, %c0_40, %c0_41] : memref<2x3x128x128xbf16, #tpu.memory_space<vmem>>, vector<1x1x32x128xbf16>
    %42 = vector.shape_cast %41 : vector<1x1x32x128xbf16> to vector<32x128xbf16>
    %43 = arith.truncf %40 : vector<64x32xf32> to vector<64x32xbf16>
    %cst_42 = arith.constant dense<0.000000e+00> : vector<64x128xf32>
    %44 = tpu.matmul %43, %42, %cst_42 {dimension_numbers = #tpu.dot_dimension_numbers<[1], [0], [0], [1], [0, 0, 1, 1], [], []>} : vector<64x32xbf16>, vector<32x128xbf16>, vector<64x128xf32> -> vector<64x128xf32>
    %c1_43 = arith.constant 1 : index
    %c0_44 = arith.constant 0 : index
    %c0_45 = arith.constant 0 : index
    %c0_46 = arith.constant 0 : index
    %45 = vector.load %arg3[%c1_43, %c0_44, %c0_45, %c0_46] : memref<2x3x1x128xf32, #tpu.memory_space<vmem>>, vector<1x1x1x128xf32>
    %46 = vector.shape_cast %45 : vector<1x1x1x128xf32> to vector<1x128xf32>
    %47 = vector.broadcast %46 : vector<1x128xf32> to vector<64x128xf32>
    %48 = arith.addf %44, %47 : vector<64x128xf32>
    %cst_47 = arith.constant 0.000000e+00 : f32
    %49 = vector.broadcast %cst_47 : f32 to vector<64x128xf32>
    %50 = arith.maximumf %48, %49 : vector<64x128xf32>
    %c1_48 = arith.constant 1 : index
    %c1_49 = arith.constant 1 : index
    %c0_50 = arith.constant 0 : index
    %c0_51 = arith.constant 0 : index
    %51 = vector.load %arg2[%c1_48, %c1_49, %c0_50, %c0_51] : memref<2x3x128x128xbf16, #tpu.memory_space<vmem>>, vector<1x1x128x128xbf16>
    %52 = vector.shape_cast %51 : vector<1x1x128x128xbf16> to vector<128x128xbf16>
    %53 = arith.truncf %50 : vector<64x128xf32> to vector<64x128xbf16>
    %cst_52 = arith.constant dense<0.000000e+00> : vector<64x128xf32>
    %54 = tpu.matmul %53, %52, %cst_52 {dimension_numbers = #tpu.dot_dimension_numbers<[1], [0], [0], [1], [0, 0, 1, 1], [], []>} : vector<64x128xbf16>, vector<128x128xbf16>, vector<64x128xf32> -> vector<64x128xf32>
    %c1_53 = arith.constant 1 : index
    %c1_54 = arith.constant 1 : index
    %c0_55 = arith.constant 0 : index
    %c0_56 = arith.constant 0 : index
    %55 = vector.load %arg3[%c1_53, %c1_54, %c0_55, %c0_56] : memref<2x3x1x128xf32, #tpu.memory_space<vmem>>, vector<1x1x1x128xf32>
    %56 = vector.shape_cast %55 : vector<1x1x1x128xf32> to vector<1x128xf32>
    %57 = vector.broadcast %56 : vector<1x128xf32> to vector<64x128xf32>
    %58 = arith.addf %54, %57 : vector<64x128xf32>
    %cst_57 = arith.constant 0.000000e+00 : f32
    %59 = vector.broadcast %cst_57 : f32 to vector<64x128xf32>
    %60 = arith.maximumf %58, %59 : vector<64x128xf32>
    %c1_58 = arith.constant 1 : index
    %c2_59 = arith.constant 2 : index
    %c0_60 = arith.constant 0 : index
    %c0_61 = arith.constant 0 : index
    %61 = vector.load %arg2[%c1_58, %c2_59, %c0_60, %c0_61] : memref<2x3x128x128xbf16, #tpu.memory_space<vmem>>, vector<1x1x128x128xbf16>
    %62 = vector.shape_cast %61 : vector<1x1x128x128xbf16> to vector<128x128xbf16>
    %63 = arith.truncf %60 : vector<64x128xf32> to vector<64x128xbf16>
    %cst_62 = arith.constant dense<0.000000e+00> : vector<64x128xf32>
    %64 = tpu.matmul %63, %62, %cst_62 {dimension_numbers = #tpu.dot_dimension_numbers<[1], [0], [0], [1], [0, 0, 1, 1], [], []>} : vector<64x128xbf16>, vector<128x128xbf16>, vector<64x128xf32> -> vector<64x128xf32>
    %c1_63 = arith.constant 1 : index
    %c2_64 = arith.constant 2 : index
    %c0_65 = arith.constant 0 : index
    %c0_66 = arith.constant 0 : index
    %65 = vector.load %arg3[%c1_63, %c2_64, %c0_65, %c0_66] : memref<2x3x1x128xf32, #tpu.memory_space<vmem>>, vector<1x1x1x128xf32>
    %66 = vector.shape_cast %65 : vector<1x1x1x128xf32> to vector<1x128xf32>
    %67 = vector.broadcast %66 : vector<1x128xf32> to vector<64x128xf32>
    %68 = arith.addf %64, %67 : vector<64x128xf32>
    %c1_67 = arith.constant 1 : index
    %c0_68 = arith.constant 0 : index
    %c0_69 = arith.constant 0 : index
    %69 = vector.load %arg4[%c1_67, %c0_68, %c0_69] : memref<2x64x128xf32, #tpu.memory_space<vmem>>, vector<1x64x128xf32>
    %70 = vector.shape_cast %69 : vector<1x64x128xf32> to vector<64x128xf32>
    %71 = vector.shape_cast %68 : vector<64x128xf32> to vector<1x64x128xf32>
    tpu.vector_store %arg4[%c1_67, %c0_68, %c0_69], %71 {strides = array<i32>} : memref<2x64x128xf32, #tpu.memory_space<vmem>>, vector<1x64x128xf32>,
    %72 = arith.truncf %68 : vector<64x128xf32> to vector<64x128xbf16>
    %cst_70 = arith.constant dense<0.000000e+00> : vector<128x128xf32>
    %73 = tpu.matmul %72, %72, %cst_70 {dimension_numbers = #tpu.dot_dimension_numbers<[0], [0], [1], [1], [0, 1, 1, 1], [], []>} : vector<64x128xbf16>, vector<64x128xbf16>, vector<128x128xf32> -> vector<128x128xf32>
    %74 = vector.extract_strided_slice %73 {offsets = [0, 0], sizes = [16, 128], strides = [1, 1]} : vector<128x128xf32> to vector<16x128xf32>
    %c1_71 = arith.constant 1 : index
    %c0_72 = arith.constant 0 : index
    %c0_73 = arith.constant 0 : index
    %75 = vector.load %arg5[%c1_71, %c0_72, %c0_73] : memref<2x16x128xf32, #tpu.memory_space<vmem>>, vector<1x16x128xf32>
    %76 = vector.shape_cast %75 : vector<1x16x128xf32> to vector<16x128xf32>
    %77 = vector.shape_cast %74 : vector<16x128xf32> to vector<1x16x128xf32>
    tpu.vector_store %arg5[%c1_71, %c0_72, %c0_73], %77 {strides = array<i32>} : memref<2x16x128xf32, #tpu.memory_space<vmem>>, vector<1x16x128xf32>,
    return
  }
  func.func @transform_0(%arg0: i32) -> (i32, i32, i32) {
    %c0_i32 = arith.constant 0 : i32
    %c0_i32_0 = arith.constant 0 : i32
    %c0_i32_1 = arith.constant 0 : i32
    %c0_i32_2 = arith.constant 0 : i32
    return %c0_i32, %c0_i32_0, %c0_i32_1 : i32, i32, i32
  }
  func.func @transform_1(%arg0: i32) -> (i32, i32, i32, i32) {
    %c0_i32 = arith.constant 0 : i32
    %c0_i32_0 = arith.constant 0 : i32
    %c0_i32_1 = arith.constant 0 : i32
    %c0_i32_2 = arith.constant 0 : i32
    %c0_i32_3 = arith.constant 0 : i32
    return %c0_i32, %c0_i32_0, %c0_i32_1, %c0_i32_2 : i32, i32, i32, i32
  }
  func.func @transform_2(%arg0: i32) -> (i32, i32, i32, i32) {
    %c0_i32 = arith.constant 0 : i32
    %c0_i32_0 = arith.constant 0 : i32
    %c0_i32_1 = arith.constant 0 : i32
    %c0_i32_2 = arith.constant 0 : i32
    %c0_i32_3 = arith.constant 0 : i32
    return %c0_i32, %c0_i32_0, %c0_i32_1, %c0_i32_2 : i32, i32, i32, i32
  }
  func.func @transform_3(%arg0: i32) -> (i32, i32, i32) {
    %c0_i32 = arith.constant 0 : i32
    %c0_i32_0 = arith.constant 0 : i32
    %c0_i32_1 = arith.constant 0 : i32
    %c0_i32_2 = arith.constant 0 : i32
    return %c0_i32, %c0_i32_0, %c0_i32_1 : i32, i32, i32
  }
  func.func @transform_4(%arg0: i32) -> (i32, i32, i32) {
    %c0_i32 = arith.constant 0 : i32
    %c0_i32_0 = arith.constant 0 : i32
    %c0_i32_1 = arith.constant 0 : i32
    %c0_i32_2 = arith.constant 0 : i32
    return %c0_i32, %c0_i32_0, %c0_i32_1 : i32, i32, i32
  }
}

</mosaic_0001>

<llo_original>
// kernel: tpu_custom_call.1
$region0: #{tpu_custom_call.1}
  #allocation0 [shape = 'u32[]', space=smem, size = 0x4, offset = 0x4, fixed_abs, tag = 'smem constant byte address 0x4 - core index']
  #allocation1 [shape = 'u32[72,128]{1,0:T(1,128)}', space=vmem, size = 0x9000, scoped, tag = 'internal scratch']
  %s0 = inlined_call_operand.vmem [shape: f32[2,64,32], index: 0, kind: input, shape index: {}]
  %s1 = inlined_call_operand.hbm [shape: bf16[2,3,128,128], index: 1, kind: input, shape index: {}]
  %s2 = inlined_call_operand.vmem [shape: f32[2,3,1,128], index: 2, kind: input, shape index: {}]
  %s3 = inlined_call_operand.hbm [shape: f32[2,64,128], index: 3, kind: output, shape index: {0}]
  %s4 = inlined_call_operand.hbm [shape: f32[2,16,128], index: 4, kind: output, shape index: {1}]
  %5 = xla_tuple %s3, %s4
  %s6 = sld [smem:[#allocation0]]
  $region34: #{tpu_custom_call.1} parent=0
    _
  %s8 = ssub.s32 1, %s6
  %s9 = scalar_select 0, %s8, %s6
  $region1: #{tpu_custom_call.1} parent=0
    #allocation2 [shape = 'u8[196608]{0}', space=vmem, size = 0x30000, scoped, tag = 'input window, operand 1, single buffered']
    #allocation3 [shape = 's32[1]{0}', space=sflag, size = 0x4, scoped, tag = 'scoped memory for tpu_custom_call.1']
    #allocation4 [shape = 's32[1]{0}', space=sflag, size = 0x4, scoped, tag = 'scoped memory for tpu_custom_call.1']
    #allocation5 [shape = 'u8[65536]{0}', space=vmem, size = 0x10000, scoped, tag = 'output window, operand 0, single buffered']
    #allocation6 [shape = 'u8[16384]{0}', space=vmem, size = 0x4000, scoped, tag = 'output window, operand 1, single buffered']
    #allocation7 [shape = 's32[1]{0}', space=sflag, size = 0x4, scoped, tag = 'scoped memory for tpu_custom_call.1']
    %10 = vsyncpa [#allocation3], 0
    %11 = vsyncpa [#allocation4], 0
    %12 = vsyncpa [#allocation7], 0
    // Predicated region
    $region2: #{tpu_custom_call.1} parent=1 // pred_check
      _
    $region3: #{tpu_custom_call.1} parent=1 // pred_check_branch
      %14 = sbr.rel (0) target = $region5
    $region4: #{tpu_custom_call.1} parent=1 // pred_region
      _
    $region5: #{tpu_custom_call.1} parent=1 // pred_fallthru
      _
    // Predicated region
    $region6: #{tpu_custom_call.1} parent=1 // pred_check
      _
    $region7: #{tpu_custom_call.1} parent=1 // pred_check_branch
      %16 = sbr.rel (0) target = $region9
    $region8: #{tpu_custom_call.1} parent=1 // pred_region
      %18 = vsyncadd [#allocation3], 0
      %s19 = sshll.u32 %s1, 4
      %s20 = int_to_ptr.hbm [resolvable:$true] %s19
      %s21 = sshll.u32 [#allocation2], 4
      %s22 = int_to_ptr.vmem [resolvable:$true] %s21
      %27 = dma.hbm_to_vmem [thread:$0]  %s20, 6144, %s22, [#allocation3], 64, 64, 4
    $region9: #{tpu_custom_call.1} parent=1 // pred_fallthru
      _
    // Predicated region
    $region10: #{tpu_custom_call.1} parent=1 // pred_check
      _
    $region11: #{tpu_custom_call.1} parent=1 // pred_check_branch
      %29 = sbr.rel (0) target = $region13
    $region12: #{tpu_custom_call.1} parent=1 // pred_region
      _
    $region13: #{tpu_custom_call.1} parent=1 // pred_fallthru
      _
    // Predicated region
    $region14: #{tpu_custom_call.1} parent=1 // pred_check
      _
    $region15: #{tpu_custom_call.1} parent=1 // pred_check_branch
      %31 = sbr.rel (0) target = $region17
    $region16: #{tpu_custom_call.1} parent=1 // pred_region
      %33 = dma.done [#allocation3], 6144
    $region17: #{tpu_custom_call.1} parent=1 // pred_fallthru
      _
    %v35 = vld [vmem:[%s0] sm:$0xff]
    %v36 = vld [vmem:[%s0 + $0x8] sm:$0xff]
    %v37 = vld [vmem:[%s0 + $0x10] sm:$0xff]
    %v38 = vld [vmem:[%s0 + $0x18] sm:$0xff]
    %v39 = vld [vmem:[%s0 + $0x20] sm:$0xff]
    %v40 = vld [vmem:[%s0 + $0x28] sm:$0xff]
    %v41 = vld [vmem:[%s0 + $0x30] sm:$0xff]
    %v42 = vld [vmem:[%s0 + $0x38] sm:$0xff]
    %v43 = vld [vmem:[#allocation2] sm:$0xf]
    %v44 = vld [vmem:[#allocation2 + $0x4] sm:$0xf]
    %v45 = vld [vmem:[#allocation2 + $0x8] sm:$0xf]
    %v46 = vld [vmem:[#allocation2 + $0xc] sm:$0xf]
    %v47 = vpack.c.bf16 %v36, %v35
    %v48 = vpack.c.bf16 %v38, %v37
    %v49 = vpack.c.bf16 %v40, %v39
    %v50 = vpack.c.bf16 %v42, %v41
    %v51 = vld [vmem:[%s2] sm:$0x1]
    %v53 = vperm.slane %v51, 0
    %v59 = vunpack.c.l.b16 %v43
    %v60 = vunpack.c.l.b16 %v44
    %v61 = vunpack.c.l.b16 %v45
    %v62 = vunpack.c.l.b16 %v46
    %v63 = vpack.c.b16 %v60, %v59
    %v64 = vpack.c.b16 %v62, %v61
    %vm67 = vcmask 261120
    %v69 = vsel %vm67, %v47, 0
    %v72 = vsel %vm67, %v48, 0
    %v75 = vsel %vm67, %v49, 0
    %v78 = vsel %vm67, %v50, 0
    %80 = vmatpush.bf16.msra.mxu0 0
    %81 = vmatpush.bf16.msra.mxu0 0
    %82 = vmatpush.bf16.msra.mxu0 0
    %83 = vmatpush.bf16.msra.mxu0 0
    %84 = vmatpush.bf16.msra.mxu0 0
    %85 = vmatpush.bf16.msra.mxu0 0
    %86 = vmatpush.bf16.msra.mxu0 %v64
    %87 = vmatpush.bf16.msra.mxu0 %v63
    %88 = vmatmul.bf16.gmra.mxu0 %v69
    %v89 = vpop.f32.mrf.mxu0
    %v90 = vadd.f32 %v53, %v89
    %v91 = vpop.f32.mrf.mxu0
    %v92 = vadd.f32 %v53, %v91
    %93 = vmatmul.bf16.gmra.mxu0 %v72
    %v94 = vpop.f32.mrf.mxu0
    %v95 = vadd.f32 %v53, %v94
    %v96 = vpop.f32.mrf.mxu0
    %v97 = vadd.f32 %v53, %v96
    %98 = vmatmul.bf16.gmra.mxu0 %v75
    %v99 = vpop.f32.mrf.mxu0
    %v100 = vadd.f32 %v53, %v99
    %v101 = vpop.f32.mrf.mxu0
    %v102 = vadd.f32 %v53, %v101
    %103 = vmatmul.bf16.gmra.mxu0 %v78
    %v104 = vpop.f32.mrf.mxu0
    %v105 = vadd.f32 %v53, %v104
    %v106 = vpop.f32.mrf.mxu0
    %v107 = vadd.f32 %v53, %v106
    %108 = vdwg.mxu0
    %v109 = vmax.f32 %v90, 0.0
    %v110 = vmax.f32 %v92, 0.0
    %v111 = vmax.f32 %v95, 0.0
    %v112 = vmax.f32 %v97, 0.0
    %v113 = vmax.f32 %v100, 0.0
    %v114 = vmax.f32 %v102, 0.0
    %v115 = vmax.f32 %v105, 0.0
    %v116 = vmax.f32 %v107, 0.0
    %s117 = scalar_lea.vmem [#allocation2], 64
    %v118 = vld [vmem:[%s117] sm:$0xf]
    %v119 = vld [vmem:[%s117 + $0x4] sm:$0xf]
    %v120 = vld [vmem:[%s117 + $0x8] sm:$0xf]
    %v121 = vld [vmem:[%s117 + $0xc] sm:$0xf]
    %v122 = vld [vmem:[%s117 + $0x10] sm:$0xf]
    %v123 = vld [vmem:[%s117 + $0x14] sm:$0xf]
    %v124 = vld [vmem:[%s117 + $0x18] sm:$0xf]
    %v125 = vld [vmem:[%s117 + $0x1c] sm:$0xf]
    %v126 = vld [vmem:[%s117 + $0x20] sm:$0xf]
    %v127 = vld [vmem:[%s117 + $0x24] sm:$0xf]
    %v128 = vld [vmem:[%s117 + $0x28] sm:$0xf]
    %v129 = vld [vmem:[%s117 + $0x2c] sm:$0xf]
    %v130 = vld [vmem:[%s117 + $0x30] sm:$0xf]
    %v131 = vld [vmem:[%s117 + $0x34] sm:$0xf]
    %v132 = vld [vmem:[%s117 + $0x38] sm:$0xf]
    %v133 = vld [vmem:[%s117 + $0x3c] sm:$0xf]
    %v134 = vpack.c.bf16 %v110, %v109
    %v135 = vpack.c.bf16 %v112, %v111
    %v136 = vpack.c.bf16 %v114, %v113
    %v137 = vpack.c.bf16 %v116, %v115
    %s138 = scalar_lea.vmem %s2, 1
    %v139 = vld [vmem:[%s138] sm:$0x1]
    %v141 = vperm.slane %v139, 0
    %v159 = vunpack.c.l.b16 %v118
    %v160 = vunpack.c.l.b16 %v119
    %v161 = vunpack.c.l.b16 %v120
    %v162 = vunpack.c.l.b16 %v121
    %v163 = vunpack.c.l.b16 %v122
    %v164 = vunpack.c.l.b16 %v123
    %v165 = vunpack.c.l.b16 %v124
    %v166 = vunpack.c.l.b16 %v125
    %v167 = vunpack.c.l.b16 %v126
    %v168 = vunpack.c.l.b16 %v127
    %v169 = vunpack.c.l.b16 %v128
    %v170 = vunpack.c.l.b16 %v129
    %v171 = vunpack.c.l.b16 %v130
    %v172 = vunpack.c.l.b16 %v131
    %v173 = vunpack.c.l.b16 %v132
    %v174 = vunpack.c.l.b16 %v133
    %v175 = vpack.c.b16 %v160, %v159
    %v176 = vpack.c.b16 %v162, %v161
    %v177 = vpack.c.b16 %v164, %v163
    %v178 = vpack.c.b16 %v166, %v165
    %v179 = vpack.c.b16 %v168, %v167
    %v180 = vpack.c.b16 %v170, %v169
    %v181 = vpack.c.b16 %v172, %v171
    %v182 = vpack.c.b16 %v174, %v173
    %191 = vmatpush.bf16.msra.mxu0 %v182
    %192 = vmatpush.bf16.msra.mxu0 %v181
    %193 = vmatpush.bf16.msra.mxu0 %v180
    %194 = vmatpush.bf16.msra.mxu0 %v179
    %195 = vmatpush.bf16.msra.mxu0 %v178
    %196 = vmatpush.bf16.msra.mxu0 %v177
    %197 = vmatpush.bf16.msra.mxu0 %v176
    %198 = vmatpush.bf16.msra.mxu0 %v175
    %199 = vmatmul.bf16.gmra.mxu0 %v134
    %v200 = vpop.f32.mrf.mxu0
    %v201 = vadd.f32 %v141, %v200
    %v202 = vpop.f32.mrf.mxu0
    %v203 = vadd.f32 %v141, %v202
    %204 = vmatmul.bf16.gmra.mxu0 %v135
    %v205 = vpop.f32.mrf.mxu0
    %v206 = vadd.f32 %v141, %v205
    %v207 = vpop.f32.mrf.mxu0
    %v208 = vadd.f32 %v141, %v207
    %209 = vmatmul.bf16.gmra.mxu0 %v136
    %v210 = vpop.f32.mrf.mxu0
    %v211 = vadd.f32 %v141, %v210
    %v212 = vpop.f32.mrf.mxu0
    %v213 = vadd.f32 %v141, %v212
    %214 = vmatmul.bf16.gmra.mxu0 %v137
    %v215 = vpop.f32.mrf.mxu0
    %v216 = vadd.f32 %v141, %v215
    %v217 = vpop.f32.mrf.mxu0
    %v218 = vadd.f32 %v141, %v217
    %219 = vdwg.mxu0
    %v220 = vmax.f32 %v201, 0.0
    %v221 = vmax.f32 %v203, 0.0
    %v222 = vmax.f32 %v206, 0.0
    %v223 = vmax.f32 %v208, 0.0
    %v224 = vmax.f32 %v211, 0.0
    %v225 = vmax.f32 %v213, 0.0
    %v226 = vmax.f32 %v216, 0.0
    %v227 = vmax.f32 %v218, 0.0
    %s228 = scalar_lea.vmem [#allocation2], 128
    %v229 = vld [vmem:[%s228] sm:$0xf]
    %v230 = vld [vmem:[%s228 + $0x4] sm:$0xf]
    %v231 = vld [vmem:[%s228 + $0x8] sm:$0xf]
    %v232 = vld [vmem:[%s228 + $0xc] sm:$0xf]
    %v233 = vld [vmem:[%s228 + $0x10] sm:$0xf]
    %v234 = vld [vmem:[%s228 + $0x14] sm:$0xf]
    %v235 = vld [vmem:[%s228 + $0x18] sm:$0xf]
    %v236 = vld [vmem:[%s228 + $0x1c] sm:$0xf]
    %v237 = vld [vmem:[%s228 + $0x20] sm:$0xf]
    %v238 = vld [vmem:[%s228 + $0x24] sm:$0xf]
    %v239 = vld [vmem:[%s228 + $0x28] sm:$0xf]
    %v240 = vld [vmem:[%s228 + $0x2c] sm:$0xf]
    %v241 = vld [vmem:[%s228 + $0x30] sm:$0xf]
    %v242 = vld [vmem:[%s228 + $0x34] sm:$0xf]
    %v243 = vld [vmem:[%s228 + $0x38] sm:$0xf]
    %v244 = vld [vmem:[%s228 + $0x3c] sm:$0xf]
    %v245 = vpack.c.bf16 %v221, %v220
    %v246 = vpack.c.bf16 %v223, %v222
    %v247 = vpack.c.bf16 %v225, %v224
    %v248 = vpack.c.bf16 %v227, %v226
    %s249 = scalar_lea.vmem %s2, 2
    %v250 = vld [vmem:[%s249] sm:$0x1]
    %v252 = vperm.slane %v250, 0
    %v270 = vunpack.c.l.b16 %v229
    %v271 = vunpack.c.l.b16 %v230
    %v272 = vunpack.c.l.b16 %v231
    %v273 = vunpack.c.l.b16 %v232
    %v274 = vunpack.c.l.b16 %v233
    %v275 = vunpack.c.l.b16 %v234
    %v276 = vunpack.c.l.b16 %v235
    %v277 = vunpack.c.l.b16 %v236
    %v278 = vunpack.c.l.b16 %v237
    %v279 = vunpack.c.l.b16 %v238
    %v280 = vunpack.c.l.b16 %v239
    %v281 = vunpack.c.l.b16 %v240
    %v282 = vunpack.c.l.b16 %v241
    %v283 = vunpack.c.l.b16 %v242
    %v284 = vunpack.c.l.b16 %v243
    %v285 = vunpack.c.l.b16 %v244
    %v286 = vpack.c.b16 %v271, %v270
    %v287 = vpack.c.b16 %v273, %v272
    %v288 = vpack.c.b16 %v275, %v274
    %v289 = vpack.c.b16 %v277, %v276
    %v290 = vpack.c.b16 %v279, %v278
    %v291 = vpack.c.b16 %v281, %v280
    %v292 = vpack.c.b16 %v283, %v282
    %v293 = vpack.c.b16 %v285, %v284
    %302 = vmatpush.bf16.msra.mxu0 %v293
    %303 = vmatpush.bf16.msra.mxu0 %v292
    %304 = vmatpush.bf16.msra.mxu0 %v291
    %305 = vmatpush.bf16.msra.mxu0 %v290
    %306 = vmatpush.bf16.msra.mxu0 %v289
    %307 = vmatpush.bf16.msra.mxu0 %v288
    %308 = vmatpush.bf16.msra.mxu0 %v287
    %309 = vmatpush.bf16.msra.mxu0 %v286
    %310 = vmatmul.bf16.gmra.mxu0 %v245
    %v311 = vpop.f32.mrf.mxu0
    %v312 = vadd.f32 %v252, %v311
    %v313 = vpop.f32.mrf.mxu0
    %v314 = vadd.f32 %v252, %v313
    %315 = vmatmul.bf16.gmra.mxu0 %v246
    %v316 = vpop.f32.mrf.mxu0
    %v317 = vadd.f32 %v252, %v316
    %v318 = vpop.f32.mrf.mxu0
    %v319 = vadd.f32 %v252, %v318
    %320 = vmatmul.bf16.gmra.mxu0 %v247
    %v321 = vpop.f32.mrf.mxu0
    %v322 = vadd.f32 %v252, %v321
    %v323 = vpop.f32.mrf.mxu0
    %v324 = vadd.f32 %v252, %v323
    %325 = vmatmul.bf16.gmra.mxu0 %v248
    %v326 = vpop.f32.mrf.mxu0
    %v327 = vadd.f32 %v252, %v326
    %v328 = vpop.f32.mrf.mxu0
    %v329 = vadd.f32 %v252, %v328
    %330 = vdwg.mxu0
    %331 = vst [vmem:[#allocation5] sm:$0xff] %v312
    %332 = vst [vmem:[#allocation5 + $0x8] sm:$0xff] %v314
    %333 = vst [vmem:[#allocation5 + $0x10] sm:$0xff] %v317
    %334 = vst [vmem:[#allocation5 + $0x18] sm:$0xff] %v319
    %335 = vst [vmem:[#allocation5 + $0x20] sm:$0xff] %v322
    %336 = vst [vmem:[#allocation5 + $0x28] sm:$0xff] %v324
    %337 = vst [vmem:[#allocation5 + $0x30] sm:$0xff] %v327
    %338 = vst [vmem:[#allocation5 + $0x38] sm:$0xff] %v329
    %v339 = vpack.c.bf16 %v314, %v312
    %v340 = vpack.c.bf16 %v319, %v317
    %v341 = vpack.c.bf16 %v324, %v322
    %v342 = vpack.c.bf16 %v329, %v327
    %343 = vxpose.xlu0.c.b16.start [1/8] %v339, 128
    %344 = vxpose.xlu0.c.b16.cont [2/8] %v340, 128
    %345 = vxpose.xlu0.c.b16.cont [3/8] %v341, 128
    %346 = vxpose.xlu0.c.b16.cont [4/8] %v342, 128
    %347 = vxpose.xlu0.c.b16.cont [5/8] 0, 128
    %348 = vxpose.xlu0.c.b16.cont [6/8] 0, 128
    %349 = vxpose.xlu0.c.b16.cont [7/8] 0, 128
    %350 = vxpose.xlu0.c.b16.end [8/8] 0, 128
    %v351 = vpop.trf.xlu0
    %v352 = vpop.trf.xlu0
    %v353 = vpop.trf.xlu0
    %v354 = vpop.trf.xlu0
    %v355 = vpop.trf.xlu0
    %v356 = vpop.trf.xlu0
    %v357 = vpop.trf.xlu0
    %v358 = vpop.trf.xlu0
    %vm359 = vcmask 523264
    %v361 = vsel %vm359, %v351, 0
    %v364 = vsel %vm359, %v352, 0
    %v367 = vsel %vm359, %v353, 0
    %v370 = vsel %vm359, %v354, 0
    %v373 = vsel %vm359, %v355, 0
    %v376 = vsel %vm359, %v356, 0
    %v379 = vsel %vm359, %v357, 0
    %v382 = vsel %vm359, %v358, 0
    %384 = vmatpush.bf16.msra.mxu0 0
    %385 = vmatpush.bf16.msra.mxu0 0
    %386 = vmatpush.bf16.msra.mxu0 0
    %387 = vmatpush.bf16.msra.mxu0 0
    %388 = vmatpush.bf16.msra.mxu0 %v342
    %389 = vmatpush.bf16.msra.mxu0 %v341
    %390 = vmatpush.bf16.msra.mxu0 %v340
    %391 = vmatpush.bf16.msra.mxu0 %v339
    %392 = vmatmul.bf16.gmra.mxu0 %v361
    %v393 = vpop.f32.mrf.mxu0
    %v394 = vadd.f32 0.0, %v393
    %v395 = vpop.f32.mrf.mxu0
    %v396 = vadd.f32 0.0, %v395
    %397 = vmatmul.bf16.gmra.mxu0 %v364
    %v398 = vpop.f32.mrf.mxu0
    %v399 = vpop.f32.mrf.mxu0
    %400 = vmatmul.bf16.gmra.mxu0 %v367
    %v401 = vpop.f32.mrf.mxu0
    %v402 = vpop.f32.mrf.mxu0
    %403 = vmatmul.bf16.gmra.mxu0 %v370
    %v404 = vpop.f32.mrf.mxu0
    %v405 = vpop.f32.mrf.mxu0
    %406 = vmatmul.bf16.gmra.mxu0 %v373
    %v407 = vpop.f32.mrf.mxu0
    %v408 = vpop.f32.mrf.mxu0
    %409 = vmatmul.bf16.gmra.mxu0 %v376
    %v410 = vpop.f32.mrf.mxu0
    %v411 = vpop.f32.mrf.mxu0
    %412 = vmatmul.bf16.gmra.mxu0 %v379
    %v413 = vpop.f32.mrf.mxu0
    %v414 = vpop.f32.mrf.mxu0
    %415 = vmatmul.bf16.gmra.mxu0 %v382
    %v416 = vpop.f32.mrf.mxu0
    %v417 = vpop.f32.mrf.mxu0
    %418 = vdwg.mxu0
    %419 = vst [vmem:[#allocation6] sm:$0xff] %v394
    %420 = vst [vmem:[#allocation6 + $0x8] sm:$0xff] %v396
    %s421 = scalar_lea.vmem %s0, 64
    %v422 = vld [vmem:[%s421] sm:$0xff]
    %v423 = vld [vmem:[%s421 + $0x8] sm:$0xff]
    %v424 = vld [vmem:[%s421 + $0x10] sm:$0xff]
    %v425 = vld [vmem:[%s421 + $0x18] sm:$0xff]
    %v426 = vld [vmem:[%s421 + $0x20] sm:$0xff]
    %v427 = vld [vmem:[%s421 + $0x28] sm:$0xff]
    %v428 = vld [vmem:[%s421 + $0x30] sm:$0xff]
    %v429 = vld [vmem:[%s421 + $0x38] sm:$0xff]
    %s430 = scalar_lea.vmem [#allocation2], 192
    %v431 = vld [vmem:[%s430] sm:$0xf]
    %v432 = vld [vmem:[%s430 + $0x4] sm:$0xf]
    %v433 = vld [vmem:[%s430 + $0x8] sm:$0xf]
    %v434 = vld [vmem:[%s430 + $0xc] sm:$0xf]
    %v435 = vpack.c.bf16 %v423, %v422
    %v436 = vpack.c.bf16 %v425, %v424
    %v437 = vpack.c.bf16 %v427, %v426
    %v438 = vpack.c.bf16 %v429, %v428
    %s439 = scalar_lea.vmem %s2, 3
    %v440 = vld [vmem:[%s439] sm:$0x1]
    %v442 = vperm.slane %v440, 0
    %v448 = vunpack.c.l.b16 %v431
    %v449 = vunpack.c.l.b16 %v432
    %v450 = vunpack.c.l.b16 %v433
    %v451 = vunpack.c.l.b16 %v434
    %v452 = vpack.c.b16 %v449, %v448
    %v453 = vpack.c.b16 %v451, %v450
    %v457 = vsel %vm67, %v435, 0
    %v460 = vsel %vm67, %v436, 0
    %v463 = vsel %vm67, %v437, 0
    %v466 = vsel %vm67, %v438, 0
    %468 = vmatpush.bf16.msra.mxu0 0
    %469 = vmatpush.bf16.msra.mxu0 0
    %470 = vmatpush.bf16.msra.mxu0 0
    %471 = vmatpush.bf16.msra.mxu0 0
    %472 = vmatpush.bf16.msra.mxu0 0
    %473 = vmatpush.bf16.msra.mxu0 0
    %474 = vmatpush.bf16.msra.mxu0 %v453
    %475 = vmatpush.bf16.msra.mxu0 %v452
    %476 = vmatmul.bf16.gmra.mxu0 %v457
    %v477 = vpop.f32.mrf.mxu0
    %v478 = vadd.f32 %v442, %v477
    %v479 = vpop.f32.mrf.mxu0
    %v480 = vadd.f32 %v442, %v479
    %481 = vmatmul.bf16.gmra.mxu0 %v460
    %v482 = vpop.f32.mrf.mxu0
    %v483 = vadd.f32 %v442, %v482
    %v484 = vpop.f32.mrf.mxu0
    %v485 = vadd.f32 %v442, %v484
    %486 = vmatmul.bf16.gmra.mxu0 %v463
    %v487 = vpop.f32.mrf.mxu0
    %v488 = vadd.f32 %v442, %v487
    %v489 = vpop.f32.mrf.mxu0
    %v490 = vadd.f32 %v442, %v489
    %491 = vmatmul.bf16.gmra.mxu0 %v466
    %v492 = vpop.f32.mrf.mxu0
    %v493 = vadd.f32 %v442, %v492
    %v494 = vpop.f32.mrf.mxu0
    %v495 = vadd.f32 %v442, %v494
    %496 = vdwg.mxu0
    %v497 = vmax.f32 %v478, 0.0
    %v498 = vmax.f32 %v480, 0.0
    %v499 = vmax.f32 %v483, 0.0
    %v500 = vmax.f32 %v485, 0.0
    %v501 = vmax.f32 %v488, 0.0
    %v502 = vmax.f32 %v490, 0.0
    %v503 = vmax.f32 %v493, 0.0
    %v504 = vmax.f32 %v495, 0.0
    %s505 = scalar_lea.vmem [#allocation2], 256
    %v506 = vld [vmem:[%s505] sm:$0xf]
    %v507 = vld [vmem:[%s505 + $0x4] sm:$0xf]
    %v508 = vld [vmem:[%s505 + $0x8] sm:$0xf]
    %v509 = vld [vmem:[%s505 + $0xc] sm:$0xf]
    %v510 = vld [vmem:[%s505 + $0x10] sm:$0xf]
    %v511 = vld [vmem:[%s505 + $0x14] sm:$0xf]
    %v512 = vld [vmem:[%s505 + $0x18] sm:$0xf]
    %v513 = vld [vmem:[%s505 + $0x1c] sm:$0xf]
    %v514 = vld [vmem:[%s505 + $0x20] sm:$0xf]
    %v515 = vld [vmem:[%s505 + $0x24] sm:$0xf]
    %v516 = vld [vmem:[%s505 + $0x28] sm:$0xf]
    %v517 = vld [vmem:[%s505 + $0x2c] sm:$0xf]
    %v518 = vld [vmem:[%s505 + $0x30] sm:$0xf]
    %v519 = vld [vmem:[%s505 + $0x34] sm:$0xf]
    %v520 = vld [vmem:[%s505 + $0x38] sm:$0xf]
    %v521 = vld [vmem:[%s505 + $0x3c] sm:$0xf]
    %v522 = vpack.c.bf16 %v498, %v497
    %v523 = vpack.c.bf16 %v500, %v499
    %v524 = vpack.c.bf16 %v502, %v501
    %v525 = vpack.c.bf16 %v504, %v503
    %s526 = scalar_lea.vmem %s2, 4
    %v527 = vld [vmem:[%s526] sm:$0x1]
    %v529 = vperm.slane %v527, 0
    %v547 = vunpack.c.l.b16 %v506
    %v548 = vunpack.c.l.b16 %v507
    %v549 = vunpack.c.l.b16 %v508
    %v550 = vunpack.c.l.b16 %v509
    %v551 = vunpack.c.l.b16 %v510
    %v552 = vunpack.c.l.b16 %v511
    %v553 = vunpack.c.l.b16 %v512
    %v554 = vunpack.c.l.b16 %v513
    %v555 = vunpack.c.l.b16 %v514
    %v556 = vunpack.c.l.b16 %v515
    %v557 = vunpack.c.l.b16 %v516
    %v558 = vunpack.c.l.b16 %v517
    %v559 = vunpack.c.l.b16 %v518
    %v560 = vunpack.c.l.b16 %v519
    %v561 = vunpack.c.l.b16 %v520
    %v562 = vunpack.c.l.b16 %v521
    %v563 = vpack.c.b16 %v548, %v547
    %v564 = vpack.c.b16 %v550, %v549
    %v565 = vpack.c.b16 %v552, %v551
    %v566 = vpack.c.b16 %v554, %v553
    %v567 = vpack.c.b16 %v556, %v555
    %v568 = vpack.c.b16 %v558, %v557
    %v569 = vpack.c.b16 %v560, %v559
    %v570 = vpack.c.b16 %v562, %v561
    %579 = vmatpush.bf16.msra.mxu0 %v570
    %580 = vmatpush.bf16.msra.mxu0 %v569
    %581 = vmatpush.bf16.msra.mxu0 %v568
    %582 = vmatpush.bf16.msra.mxu0 %v567
    %583 = vmatpush.bf16.msra.mxu0 %v566
    %584 = vmatpush.bf16.msra.mxu0 %v565
    %585 = vmatpush.bf16.msra.mxu0 %v564
    %586 = vmatpush.bf16.msra.mxu0 %v563
    %587 = vmatmul.bf16.gmra.mxu0 %v522
    %v588 = vpop.f32.mrf.mxu0
    %v589 = vadd.f32 %v529, %v588
    %v590 = vpop.f32.mrf.mxu0
    %v591 = vadd.f32 %v529, %v590
    %592 = vmatmul.bf16.gmra.mxu0 %v523
    %v593 = vpop.f32.mrf.mxu0
    %v594 = vadd.f32 %v529, %v593
    %v595 = vpop.f32.mrf.mxu0
    %v596 = vadd.f32 %v529, %v595
    %597 = vmatmul.bf16.gmra.mxu0 %v524
    %v598 = vpop.f32.mrf.mxu0
    %v599 = vadd.f32 %v529, %v598
    %v600 = vpop.f32.mrf.mxu0
    %v601 = vadd.f32 %v529, %v600
    %602 = vmatmul.bf16.gmra.mxu0 %v525
    %v603 = vpop.f32.mrf.mxu0
    %v604 = vadd.f32 %v529, %v603
    %v605 = vpop.f32.mrf.mxu0
    %v606 = vadd.f32 %v529, %v605
    %607 = vdwg.mxu0
    %v608 = vmax.f32 %v589, 0.0
    %v609 = vmax.f32 %v591, 0.0
    %v610 = vmax.f32 %v594, 0.0
    %v611 = vmax.f32 %v596, 0.0
    %v612 = vmax.f32 %v599, 0.0
    %v613 = vmax.f32 %v601, 0.0
    %v614 = vmax.f32 %v604, 0.0
    %v615 = vmax.f32 %v606, 0.0
    %s616 = scalar_lea.vmem [#allocation2], 320
    %v617 = vld [vmem:[%s616] sm:$0xf]
    %v618 = vld [vmem:[%s616 + $0x4] sm:$0xf]
    %v619 = vld [vmem:[%s616 + $0x8] sm:$0xf]
    %v620 = vld [vmem:[%s616 + $0xc] sm:$0xf]
    %v621 = vld [vmem:[%s616 + $0x10] sm:$0xf]
    %v622 = vld [vmem:[%s616 + $0x14] sm:$0xf]
    %v623 = vld [vmem:[%s616 + $0x18] sm:$0xf]
    %v624 = vld [vmem:[%s616 + $0x1c] sm:$0xf]
    %v625 = vld [vmem:[%s616 + $0x20] sm:$0xf]
    %v626 = vld [vmem:[%s616 + $0x24] sm:$0xf]
    %v627 = vld [vmem:[%s616 + $0x28] sm:$0xf]
    %v628 = vld [vmem:[%s616 + $0x2c] sm:$0xf]
    %v629 = vld [vmem:[%s616 + $0x30] sm:$0xf]
    %v630 = vld [vmem:[%s616 + $0x34] sm:$0xf]
    %v631 = vld [vmem:[%s616 + $0x38] sm:$0xf]
    %v632 = vld [vmem:[%s616 + $0x3c] sm:$0xf]
    %v633 = vpack.c.bf16 %v609, %v608
    %v634 = vpack.c.bf16 %v611, %v610
    %v635 = vpack.c.bf16 %v613, %v612
    %v636 = vpack.c.bf16 %v615, %v614
    %s637 = scalar_lea.vmem %s2, 5
    %v638 = vld [vmem:[%s637] sm:$0x1]
    %v640 = vperm.slane %v638, 0
    %v658 = vunpack.c.l.b16 %v617
    %v659 = vunpack.c.l.b16 %v618
    %v660 = vunpack.c.l.b16 %v619
    %v661 = vunpack.c.l.b16 %v620
    %v662 = vunpack.c.l.b16 %v621
    %v663 = vunpack.c.l.b16 %v622
    %v664 = vunpack.c.l.b16 %v623
    %v665 = vunpack.c.l.b16 %v624
    %v666 = vunpack.c.l.b16 %v625
    %v667 = vunpack.c.l.b16 %v626
    %v668 = vunpack.c.l.b16 %v627
    %v669 = vunpack.c.l.b16 %v628
    %v670 = vunpack.c.l.b16 %v629
    %v671 = vunpack.c.l.b16 %v630
    %v672 = vunpack.c.l.b16 %v631
    %v673 = vunpack.c.l.b16 %v632
    %v674 = vpack.c.b16 %v659, %v658
    %v675 = vpack.c.b16 %v661, %v660
    %v676 = vpack.c.b16 %v663, %v662
    %v677 = vpack.c.b16 %v665, %v664
    %v678 = vpack.c.b16 %v667, %v666
    %v679 = vpack.c.b16 %v669, %v668
    %v680 = vpack.c.b16 %v671, %v670
    %v681 = vpack.c.b16 %v673, %v672
    %690 = vmatpush.bf16.msra.mxu0 %v681
    %691 = vmatpush.bf16.msra.mxu0 %v680
    %692 = vmatpush.bf16.msra.mxu0 %v679
    %693 = vmatpush.bf16.msra.mxu0 %v678
    %694 = vmatpush.bf16.msra.mxu0 %v677
    %695 = vmatpush.bf16.msra.mxu0 %v676
    %696 = vmatpush.bf16.msra.mxu0 %v675
    %697 = vmatpush.bf16.msra.mxu0 %v674
    %698 = vmatmul.bf16.gmra.mxu0 %v633
    %v699 = vpop.f32.mrf.mxu0
    %v700 = vadd.f32 %v640, %v699
    %v701 = vpop.f32.mrf.mxu0
    %v702 = vadd.f32 %v640, %v701
    %703 = vmatmul.bf16.gmra.mxu0 %v634
    %v704 = vpop.f32.mrf.mxu0
    %v705 = vadd.f32 %v640, %v704
    %v706 = vpop.f32.mrf.mxu0
    %v707 = vadd.f32 %v640, %v706
    %708 = vmatmul.bf16.gmra.mxu0 %v635
    %v709 = vpop.f32.mrf.mxu0
    %v710 = vadd.f32 %v640, %v709
    %v711 = vpop.f32.mrf.mxu0
    %v712 = vadd.f32 %v640, %v711
    %713 = vmatmul.bf16.gmra.mxu0 %v636
    %v714 = vpop.f32.mrf.mxu0
    %v715 = vadd.f32 %v640, %v714
    %v716 = vpop.f32.mrf.mxu0
    %v717 = vadd.f32 %v640, %v716
    %718 = vdwg.mxu0
    %s719 = scalar_lea.vmem [#allocation5], 64
    %720 = vst [vmem:[%s719] sm:$0xff] %v700
    %721 = vst [vmem:[%s719 + $0x8] sm:$0xff] %v702
    %722 = vst [vmem:[%s719 + $0x10] sm:$0xff] %v705
    %723 = vst [vmem:[%s719 + $0x18] sm:$0xff] %v707
    %724 = vst [vmem:[%s719 + $0x20] sm:$0xff] %v710
    %725 = vst [vmem:[%s719 + $0x28] sm:$0xff] %v712
    %726 = vst [vmem:[%s719 + $0x30] sm:$0xff] %v715
    %727 = vst [vmem:[%s719 + $0x38] sm:$0xff] %v717
    %v728 = vpack.c.bf16 %v702, %v700
    %v729 = vpack.c.bf16 %v707, %v705
    %v730 = vpack.c.bf16 %v712, %v710
    %v731 = vpack.c.bf16 %v717, %v715
    %732 = vxpose.xlu0.c.b16.start [1/8] %v728, 128
    %733 = vxpose.xlu0.c.b16.cont [2/8] %v729, 128
    %734 = vxpose.xlu0.c.b16.cont [3/8] %v730, 128
    %735 = vxpose.xlu0.c.b16.cont [4/8] %v731, 128
    %736 = vxpose.xlu0.c.b16.cont [5/8] 0, 128
    %737 = vxpose.xlu0.c.b16.cont [6/8] 0, 128
    %738 = vxpose.xlu0.c.b16.cont [7/8] 0, 128
    %739 = vxpose.xlu0.c.b16.end [8/8] 0, 128
    %v740 = vpop.trf.xlu0
    %v741 = vpop.trf.xlu0
    %v742 = vpop.trf.xlu0
    %v743 = vpop.trf.xlu0
    %v744 = vpop.trf.xlu0
    %v745 = vpop.trf.xlu0
    %v746 = vpop.trf.xlu0
    %v747 = vpop.trf.xlu0
    %v749 = vsel %vm359, %v740, 0
    %v752 = vsel %vm359, %v741, 0
    %v755 = vsel %vm359, %v742, 0
    %v758 = vsel %vm359, %v743, 0
    %v761 = vsel %vm359, %v744, 0
    %v764 = vsel %vm359, %v745, 0
    %v767 = vsel %vm359, %v746, 0
    %v770 = vsel %vm359, %v747, 0
    %772 = vmatpush.bf16.msra.mxu0 0
    %773 = vmatpush.bf16.msra.mxu0 0
    %774 = vmatpush.bf16.msra.mxu0 0
    %775 = vmatpush.bf16.msra.mxu0 0
    %776 = vmatpush.bf16.msra.mxu0 %v731
    %777 = vmatpush.bf16.msra.mxu0 %v730
    %778 = vmatpush.bf16.msra.mxu0 %v729
    %779 = vmatpush.bf16.msra.mxu0 %v728
    %780 = vmatmul.bf16.gmra.mxu0 %v749
    %v781 = vpop.f32.mrf.mxu0
    %v782 = vadd.f32 0.0, %v781
    %v783 = vpop.f32.mrf.mxu0
    %v784 = vadd.f32 0.0, %v783
    %785 = vmatmul.bf16.gmra.mxu0 %v752
    %v786 = vpop.f32.mrf.mxu0
    %v787 = vpop.f32.mrf.mxu0
    %788 = vmatmul.bf16.gmra.mxu0 %v755
    %v789 = vpop.f32.mrf.mxu0
    %v790 = vpop.f32.mrf.mxu0
    %791 = vmatmul.bf16.gmra.mxu0 %v758
    %v792 = vpop.f32.mrf.mxu0
    %v793 = vpop.f32.mrf.mxu0
    %794 = vmatmul.bf16.gmra.mxu0 %v761
    %v795 = vpop.f32.mrf.mxu0
    %v796 = vpop.f32.mrf.mxu0
    %797 = vmatmul.bf16.gmra.mxu0 %v764
    %v798 = vpop.f32.mrf.mxu0
    %v799 = vpop.f32.mrf.mxu0
    %800 = vmatmul.bf16.gmra.mxu0 %v767
    %v801 = vpop.f32.mrf.mxu0
    %v802 = vpop.f32.mrf.mxu0
    %803 = vmatmul.bf16.gmra.mxu0 %v770
    %v804 = vpop.f32.mrf.mxu0
    %v805 = vpop.f32.mrf.mxu0
    %806 = vdwg.mxu0
    %s807 = scalar_lea.vmem [#allocation6], 16
    %808 = vst [vmem:[%s807] sm:$0xff] %v782
    %809 = vst [vmem:[%s807 + $0x8] sm:$0xff] %v784
    // Predicated region
    $region18: #{tpu_custom_call.1} parent=1 // pred_check
      _
    $region19: #{tpu_custom_call.1} parent=1 // pred_check_branch
      %811 = sbr.rel (0) target = $region21
    $region20: #{tpu_custom_call.1} parent=1 // pred_region
      %813 = vsyncadd [#allocation4], 0
      %s814 = sshll.u32 [#allocation5], 4
      %s815 = int_to_ptr.vmem [resolvable:$true] %s814
      %s816 = sshll.u32 %s3, 4
      %s817 = int_to_ptr.hbm [resolvable:$true] %s816
      %822 = dma.vmem_to_hbm [thread:$0]  %s815, 2048, %s817, [#allocation4], 128, 128, 8
    $region21: #{tpu_custom_call.1} parent=1 // pred_fallthru
      _
    // Predicated region
    $region22: #{tpu_custom_call.1} parent=1 // pred_check
      _
    $region23: #{tpu_custom_call.1} parent=1 // pred_check_branch
      %824 = sbr.rel (0) target = $region25
    $region24: #{tpu_custom_call.1} parent=1 // pred_region
      %826 = vsyncadd [#allocation7], 0
      %s827 = sshll.u32 [#allocation6], 4
      %s828 = int_to_ptr.vmem [resolvable:$true] %s827
      %s829 = sshll.u32 %s4, 4
      %s830 = int_to_ptr.hbm [resolvable:$true] %s829
      %835 = dma.vmem_to_hbm [thread:$0]  %s828, 512, %s830, [#allocation7], 128, 128, 8
    $region25: #{tpu_custom_call.1} parent=1 // pred_fallthru
      _
    // Predicated region
    $region26: #{tpu_custom_call.1} parent=1 // pred_check
      _
    $region27: #{tpu_custom_call.1} parent=1 // pred_check_branch
      %837 = sbr.rel (0) target = $region29
    $region28: #{tpu_custom_call.1} parent=1 // pred_region
      %839 = dma.done [#allocation4], 2048
    $region29: #{tpu_custom_call.1} parent=1 // pred_fallthru
      _
    // Predicated region
    $region30: #{tpu_custom_call.1} parent=1 // pred_check
      _
    $region31: #{tpu_custom_call.1} parent=1 // pred_check_branch
      %841 = sbr.rel (0) target = $region33
    $region32: #{tpu_custom_call.1} parent=1 // pred_region
      %843 = dma.done [#allocation7], 512
    $region33: #{tpu_custom_call.1} parent=1 // pred_fallthru
      _
    %844 = vsyncpa [#allocation3], 1
    %845 = vsyncpa [#allocation4], 1
    %846 = vsyncpa [#allocation7], 1

</llo_original>
